<compile_context>
chip_gen: v6e
topology: v6e:2x2x1
jax: 0.10.0
libtpu: 0.0.40
codegen_flags: <defaults>
</compile_context>

<pallas_src>
import numpy as np
import jax
import jax.numpy as jnp
from jax.experimental import pallas as pl
from jax.experimental.pallas import tpu as pltpu


def _copy_kernel(x_ref, o_ref):
    # Elementwise copy of the current VMEM tile.
    o_ref[...] = x_ref[...]


_WIDTH_CAP = 8192  # max lane-dense last dim we search for


def _tile_params():
    """(per-buffer tile bytes, scoped vmem limit) chosen per TPU generation."""
    try:
        kind = jax.devices()[0].device_kind.lower()
    except Exception:
        kind = ""
    if "v5 lite" in kind or "v5e" in kind or "v5lite" in kind:
        # v5e (~0.82 TB/s): 4 MiB tiles already make per-step overhead <4%.
        return 4 * 1024 * 1024, 32 * 1024 * 1024
    if "v6" in kind:
        # v6e: 128 MiB physical VMEM; bigger tiles amortize ~0.35 us/step cost.
        return 16 * 1024 * 1024, 96 * 1024 * 1024
    # v7x (64 MiB VMEM per TC) and unknown chips: 2 in + 2 out x 8 MiB = 32 MiB.
    return 8 * 1024 * 1024, 40 * 1024 * 1024


def _pick_width(n):
    """Largest divisor of n that is a multiple of 128 (capped), else None."""
    if n < 128 or n % 128 != 0:
        return None
    cap = min(_WIDTH_CAP, n)
    for w in range(cap - cap % 128, 127, -128):
        if n % w == 0:
            return w
    return 128  # n % 128 == 0, so 128 always divides n


@jax.jit
def identity(x: jax.Array) -> jax.Array:
    """Exact identity (PyTorch Identity.forward): returns an array equal to x."""
    orig_shape = x.shape
    n = int(np.prod(orig_shape)) if x.ndim > 0 else 1
    if n == 0:
        return x  # nothing to copy

    itemsize = jnp.dtype(x.dtype).itemsize
    max_tile_bytes, vmem_limit = _tile_params()

    flat = x.reshape(-1)  # bitcast under jit
    width = _pick_width(n)
    if width is None:
        # Ragged fallback: pad flat length up to a multiple of 1024 (8 x 128),
        # run the tiled copy, slice the tail off afterwards.
        width = 1024
        n_pad = pl.cdiv(n, width) * width
        flat = jnp.pad(flat, (0, n_pad - n))
    else:
        n_pad = n
    r = n_pad // width
    x2 = flat.reshape(r, width)

    # Row tile: dtype-aware sublane multiple, per-buffer budget per generation.
    sub = max(8, 32 // itemsize)              # 8 f32, 16 bf16, 32 int8/fp8
    tr_cap = max(1, max_tile_bytes // (width * itemsize))
    if tr_cap >= r:
        tr = r                                # block == full dims is always legal
    else:
        tr = max(sub, (tr_cap // sub) * sub)  # multiple of sublane packing
    grid = (pl.cdiv(r, tr),)

    out2 = pl.pallas_call(
        _copy_kernel,
        out_shape=jax.ShapeDtypeStruct((r, width), x2.dtype),
        grid_spec=pltpu.PrefetchScalarGridSpec(
            num_scalar_prefetch=0,
            grid=grid,
            in_specs=[pl.BlockSpec((tr, width), lambda i: (i, 0))],
            out_specs=pl.BlockSpec((tr, width), lambda i: (i, 0)),
        ),
        compiler_params=pltpu.CompilerParams(
            dimension_semantics=("parallel",),
            vmem_limit_bytes=vmem_limit,
        ),
        cost_estimate=pl.CostEstimate(
            flops=0, transcendentals=0, bytes_accessed=2 * n_pad * itemsize
        ),
    )(x2)

    out_flat = out2.reshape(-1)
    if n_pad != n:
        out_flat = out_flat[:n]
    return out_flat.reshape(orig_shape)


if __name__ == "__main__":
    key = jax.random.PRNGKey(0)

    # Primary check: shape implied by the module's typical use.
    x = jax.random.normal(key, (2, 4, 16, 16), dtype=jnp.float32)
    x_host = np.asarray(jax.device_get(x))
    y = identity(x)
    jax.block_until_ready(y)
    assert y.shape == x.shape and y.dtype == x.dtype
    assert np.array_equal(np.asarray(jax.device_get(y)), x_host)

    # Secondary check: ragged element count exercises the padded fallback path.
    x2 = jax.random.normal(jax.random.PRNGKey(1), (3, 5, 7), dtype=jnp.float32)
    x2_host = np.asarray(jax.device_get(x2))
    y2 = identity(x2)
    jax.block_until_ready(y2)
    assert y2.shape == x2.shape and y2.dtype == x2.dtype
    assert np.array_equal(np.asarray(jax.device_get(y2)), x2_host)

    print("KERNEL_OK")
</pallas_src>

<mosaic_0001>
module attributes {stable_mosaic.version = 11 : i64} {
  func.func @_copy_kernel(%arg0: i32, %arg1: memref<1x2048xf32, #tpu.memory_space<vmem>>, %arg2: memref<1x2048xf32, #tpu.memory_space<vmem>>) attributes {dimension_semantics = [#tpu.dimension_semantics<parallel>], iteration_bounds = array<i64: 1>, scalar_prefetch = 0 : i64, scratch_operands = 0 : i64, tpu.core_type = #tpu.core_type<tc>, window_params = [{transform_indices = @transform_0, window_bounds = array<i64: 1, 2048>}, {transform_indices = @transform_1, window_bounds = array<i64: 1, 2048>}]} {
    %c0 = arith.constant 0 : index
    %c0_0 = arith.constant 0 : index
    %0 = vector.load %arg1[%c0, %c0_0] : memref<1x2048xf32, #tpu.memory_space<vmem>>, vector<1x2048xf32>
    %c0_1 = arith.constant 0 : index
    %c0_2 = arith.constant 0 : index
    %1 = vector.load %arg2[%c0_1, %c0_2] : memref<1x2048xf32, #tpu.memory_space<vmem>>, vector<1x2048xf32>
    tpu.vector_store %arg2[%c0_1, %c0_2], %0 {strides = array<i32>} : memref<1x2048xf32, #tpu.memory_space<vmem>>, vector<1x2048xf32>,
    return
  }
  func.func @transform_0(%arg0: i32) -> (i32, i32) {
    %c0_i32 = arith.constant 0 : i32
    %c0_i32_0 = arith.constant 0 : i32
    return %arg0, %c0_i32 : i32, i32
  }
  func.func @transform_1(%arg0: i32) -> (i32, i32) {
    %c0_i32 = arith.constant 0 : i32
    %c0_i32_0 = arith.constant 0 : i32
    return %arg0, %c0_i32 : i32, i32
  }
}

</mosaic_0001>

<llo_original>
// kernel: identity.1
$region0: #{identity.1}
  #allocation0 [shape = 'u32[]', space=smem, size = 0x4, offset = 0x4, fixed_abs, tag = 'smem constant byte address 0x4 - core index']
  #allocation1 [shape = 'u32[144,128]{1,0:T(1,128)}', space=vmem, size = 0x12000, scoped, tag = 'internal scratch']
  %s0 = inlined_call_operand.vmem [shape: f32[1,2048], index: 0, kind: input, shape index: {}]
  %s1 = inlined_call_operand.vmem [shape: f32[1,2048], index: 1, kind: output, shape index: {}]
  %s2 = sld [smem:[#allocation0]]
  $region14: #{identity.1} parent=0
    _
  %s4 = ssub.s32 1, %s2
  %s5 = scalar_select 0, %s4, %s2
  // Predicated region
  $region2: #{identity.1} parent=0 // pred_check
    _
  $region3: #{identity.1} parent=0 // pred_check_branch
    %7 = sbr.rel (0) target = $region5
  $region4: #{identity.1} parent=0 // pred_region
    _
  $region5: #{identity.1} parent=0 // pred_fallthru
    _
  %v8 = vld [vmem:[%s0] sm:$0xff]
  %v9 = vld [vmem:[%s0 + $0x8] sm:$0xff]
  %10 = vst [vmem:[%s1] sm:$0xff] %v8
  %11 = vst [vmem:[%s1 + $0x8] sm:$0xff] %v9
  // Predicated region
  $region6: #{identity.1} parent=0 // pred_check
    _
  $region7: #{identity.1} parent=0 // pred_check_branch
    %13 = sbr.rel (0) target = $region9
  $region8: #{identity.1} parent=0 // pred_region
    _
  $region9: #{identity.1} parent=0 // pred_fallthru
    _
  // Predicated region
  $region10: #{identity.1} parent=0 // pred_check
    _
  $region11: #{identity.1} parent=0 // pred_check_branch
    %15 = sbr.rel (0) target = $region13
  $region12: #{identity.1} parent=0 // pred_region
    _
  $region13: #{identity.1} parent=0 // pred_fallthru
    _

</llo_original>
